<compile_context>
chip_gen: v7x
topology: tpu7x:2x2x1
jax: 0.10.0
libtpu: 0.0.40
codegen_flags: <defaults>
</compile_context>

<pallas_src>
import jax
import jax.numpy as jnp
from jax.experimental import pallas as pl
from jax.experimental.pallas import tpu as pltpu


def _identity_kernel(x_ref, o_ref):
    # Straight tile copy: load the current VMEM tile and store it back out.
    o_ref[...] = x_ref[...]


# Lane-dense last dimension (multiple of 128) for full-width unmasked stores.
_LANES = 512
# Target ~4 MiB per tile: in + out, double-buffered -> ~16 MiB VMEM, safe on
# v5e / v6e / v7x with the explicit 32 MiB scoped-VMEM limit below.
_TARGET_TILE_BYTES = 4 * 1024 * 1024


def base_connector_forward(x: jnp.ndarray, *, in_channels: int, out_channels: int) -> jnp.ndarray:
    """JAX/Pallas equivalent of BaseConnector.forward (identity with channel check)."""
    # Mirror the PyTorch assertion (static shape check at trace time).
    assert x.shape[1] == in_channels == out_channels, (
        f"channel mismatch: x has {x.shape[1]}, expected "
        f"in={in_channels}, out={out_channels}"
    )

    orig_shape = x.shape
    dtype = x.dtype
    itemsize = jnp.dtype(dtype).itemsize

    # Sublane packing multiple for the second-to-last block dim:
    # 8 for 4-byte dtypes, 16 for 2-byte, 32 for 1-byte.
    sub = max(8, 32 // itemsize)

    # Largest tile row-count (multiple of `sub`) that keeps a tile near the
    # target size. Never fall back to a full-array block for large inputs.
    max_block_rows = max(sub, (_TARGET_TILE_BYTES // (_LANES * itemsize)) // sub * sub)

    total = x.size
    flat = x.reshape(-1)  # glue reshape; kernel works on a lane-dense 2-D view

    rows = pl.cdiv(total, _LANES)
    block_rows = rows if rows <= max_block_rows else max_block_rows

    # Deterministic tiling: pad (rarely needed) so rows divides evenly into
    # block_rows-sized tiles instead of changing the block shape per input.
    padded_rows = pl.cdiv(rows, block_rows) * block_rows
    padded_total = padded_rows * _LANES
    if padded_total != total:
        flat = jnp.pad(flat, (0, padded_total - total))

    x2d = flat.reshape(padded_rows, _LANES)
    grid = (padded_rows // block_rows,)

    out2d = pl.pallas_call(
        _identity_kernel,
        out_shape=jax.ShapeDtypeStruct((padded_rows, _LANES), dtype),
        grid=grid,
        in_specs=[pl.BlockSpec((block_rows, _LANES), lambda i: (i, 0))],
        out_specs=pl.BlockSpec((block_rows, _LANES), lambda i: (i, 0)),
        # Identity op: donate the input buffer to the output. Under jit this
        # removes the separate output allocation; XLA inserts a defensive copy
        # only if the caller still needs the original buffer.
        input_output_aliases={0: 0},
        compiler_params=pltpu.CompilerParams(
            dimension_semantics=("parallel",),
            vmem_limit_bytes=32 * 1024 * 1024,
        ),
    )(x2d)

    out_flat = out2d.reshape(-1)
    if padded_total != total:
        out_flat = out_flat[:total]
    return out_flat.reshape(orig_shape)


if __name__ == "__main__":
    # Deterministic example input, NCHW, small shapes consistent with the module.
    key = jax.random.PRNGKey(0)
    N, C, H, W = 2, 4, 16, 16
    x = jax.random.normal(key, (N, C, H, W), dtype=jnp.float32)

    # BaseConnector has no learnable parameters (in_channels/out_channels are
    # only used for the shape assertion), so there is nothing to initialize.
    y = base_connector_forward(x, in_channels=C, out_channels=C)
    y = jax.block_until_ready(y)

    # Identity semantics check.
    assert y.shape == x.shape and y.dtype == x.dtype
    assert bool(jnp.all(y == x))

    print("KERNEL_OK")
</pallas_src>

<mosaic_0001>
module attributes {stable_mosaic.version = 11 : i64} {
  func.func @_identity_kernel(%arg0: i32, %arg1: memref<4x512xf32, #tpu.memory_space<vmem>>, %arg2: memref<4x512xf32, #tpu.memory_space<vmem>>) attributes {dimension_semantics = [#tpu.dimension_semantics<parallel>], iteration_bounds = array<i64: 1>, scalar_prefetch = 0 : i64, scratch_operands = 0 : i64, tpu.core_type = #tpu.core_type<tc>, window_params = [{transform_indices = @transform_0, window_bounds = array<i64: 4, 512>}, {transform_indices = @transform_1, window_bounds = array<i64: 4, 512>}]} {
    %c0 = arith.constant 0 : index
    %c0_0 = arith.constant 0 : index
    %0 = vector.load %arg1[%c0, %c0_0] : memref<4x512xf32, #tpu.memory_space<vmem>>, vector<4x512xf32>
    %c0_1 = arith.constant 0 : index
    %c0_2 = arith.constant 0 : index
    %1 = vector.load %arg2[%c0_1, %c0_2] : memref<4x512xf32, #tpu.memory_space<vmem>>, vector<4x512xf32>
    tpu.vector_store %arg2[%c0_1, %c0_2], %0 {strides = array<i32>} : memref<4x512xf32, #tpu.memory_space<vmem>>, vector<4x512xf32>,
    return
  }
  func.func @transform_0(%arg0: i32) -> (i32, i32) {
    %c0_i32 = arith.constant 0 : i32
    %c0_i32_0 = arith.constant 0 : i32
    return %arg0, %c0_i32 : i32, i32
  }
  func.func @transform_1(%arg0: i32) -> (i32, i32) {
    %c0_i32 = arith.constant 0 : i32
    %c0_i32_0 = arith.constant 0 : i32
    return %arg0, %c0_i32 : i32, i32
  }
}

</mosaic_0001>

<llo_original>
// kernel: tpu_custom_call.1
$region0: #{tpu_custom_call.1}
  #allocation0 [shape = 'u32[]', space=smem, size = 0x4, offset = 0x4, fixed_abs, tag = 'smem constant byte address 0x4 - core index']
  #allocation1 [shape = 'u32[144,128]{1,0:T(1,128)}', space=vmem, size = 0x12000, scoped, tag = 'internal scratch']
  %s0 = inlined_call_operand.hbm [shape: f32[4,512], index: 0, kind: input, shape index: {}, may-alias: {0,1}]
  %s1 = inlined_call_operand.hbm [shape: f32[4,512], index: 1, kind: output, shape index: {}, may-alias: {0,1}]
  %s2 = sld [smem:[#allocation0]]
  $region18: #{tpu_custom_call.1} parent=0
    _
  %s4 = ssub.s32 1, %s2
  %s5 = scalar_select 0, %s4, %s2
  $region1: #{tpu_custom_call.1} parent=0
    #allocation2 [shape = 'u8[8192]{0}', space=vmem, size = 0x2000, scoped, tag = 'input window, operand 0, single buffered']
    #allocation3 [shape = 's32[1]{0}', space=sflag, size = 0x4, scoped, tag = 'scoped memory for tpu_custom_call.1']
    #allocation4 [shape = 's32[1]{0}', space=sflag, size = 0x4, scoped, tag = 'scoped memory for tpu_custom_call.1']
    #allocation5 [shape = 'u8[8192]{0}', space=vmem, size = 0x2000, scoped, tag = 'output window, operand 0, single buffered']
    %6 = vsyncpa [#allocation3], 0
    %7 = vsyncpa [#allocation4], 0
    // Predicated region
    $region2: #{tpu_custom_call.1} parent=1 // pred_check
      _
    $region3: #{tpu_custom_call.1} parent=1 // pred_check_branch
      %9 = sbr.rel (0) target = $region5
    $region4: #{tpu_custom_call.1} parent=1 // pred_region
      %s11 = ssub.s32 256, 256
      %12 = vsyncadd [#allocation3], %s11
      %s14 = sshll.u32 [#allocation2], 4
      %s15 = int_to_ptr.vmem [resolvable:$true] %s14
      %17 = dma.hbm_to_vmem [thread:$0]  %s0, 256, %s15, [#allocation3]
    $region5: #{tpu_custom_call.1} parent=1 // pred_fallthru
      _
    // Predicated region
    $region6: #{tpu_custom_call.1} parent=1 // pred_check
      _
    $region7: #{tpu_custom_call.1} parent=1 // pred_check_branch
      %19 = sbr.rel (0) target = $region9
    $region8: #{tpu_custom_call.1} parent=1 // pred_region
      %20 = dma.done [#allocation3], 256
    $region9: #{tpu_custom_call.1} parent=1 // pred_fallthru
      _
    %v21 = vld [vmem:[#allocation2] sm:$0xff]
    %v22 = vld [vmem:[#allocation2 + $0x8] sm:$0xff]
    %23 = vst [vmem:[#allocation5] sm:$0xff] %v21
    %24 = vst [vmem:[#allocation5 + $0x8] sm:$0xff] %v22
    // Predicated region
    $region10: #{tpu_custom_call.1} parent=1 // pred_check
      _
    $region11: #{tpu_custom_call.1} parent=1 // pred_check_branch
      %26 = sbr.rel (0) target = $region13
    $region12: #{tpu_custom_call.1} parent=1 // pred_region
      %s28 = ssub.s32 256, 256
      %29 = vsyncadd [#allocation4], %s28
      %s31 = sshll.u32 [#allocation5], 4
      %s32 = int_to_ptr.vmem [resolvable:$true] %s31
      %34 = dma.vmem_to_hbm [thread:$0]  %s32, 256, %s1, [#allocation4]
    $region13: #{tpu_custom_call.1} parent=1 // pred_fallthru
      _
    // Predicated region
    $region14: #{tpu_custom_call.1} parent=1 // pred_check
      _
    $region15: #{tpu_custom_call.1} parent=1 // pred_check_branch
      %36 = sbr.rel (0) target = $region17
    $region16: #{tpu_custom_call.1} parent=1 // pred_region
      %37 = dma.done [#allocation4], 256
    $region17: #{tpu_custom_call.1} parent=1 // pred_fallthru
      _
    %38 = vsyncpa [#allocation3], 1
    %39 = vsyncpa [#allocation4], 1

</llo_original>
